<compile_context>
chip_gen: v5e
topology: v5e:2x2
jax: 0.10.0
libtpu: 0.0.40
codegen_flags: <defaults>
</compile_context>

<pallas_src>
import functools

import jax
import jax.numpy as jnp
from jax.experimental import pallas as pl
from jax.experimental.pallas import tpu as pltpu

D_IN, D_H1, D_H2, D_OUT = 30, 15, 8, 1

# Packed parameter slab (PyTorch [out, in] layout, always f32):
#   rows  0:15 -> W1 (15, 30) in cols 0:30,  b1 (15,) in col 30
#   rows 16:24 -> W2 (8, 15)  in cols 0:15,  b2 (8,)  in col 15
#   row  24    -> W3 (1, 8)   in cols 0:8,   b3 (1,)  in col 8
SLAB_R, SLAB_C = 32, 32


def mlp_kernel(x_ref, p_ref, o_ref):
    x = x_ref[...]                        # (tm, 30), caller dtype (f32 or bf16)
    cdt = x.dtype
    hi = jax.lax.Precision.HIGHEST

    w1 = p_ref[0:15, 0:30]                # f32 (15, 30)
    b1 = p_ref[0:15, 30:31]               # f32 (15, 1)
    w2 = p_ref[16:24, 0:15]               # f32 (8, 15)
    b2 = p_ref[16:24, 15:16]              # f32 (8, 1)
    w3 = p_ref[24:25, 0:8]                # f32 (1, 8)
    b3 = p_ref[24:25, 8:9]                # f32 (1, 1)

    # Layer 1: h1[o, b] = sum_k W1[o, k] * x[b, k]  (A @ B^T MXU pattern).
    # Batch lands on the lane axis and stays there for the rest of the net.
    h1 = jax.lax.dot_general(w1.astype(cdt), x, (((1,), (1,)), ((), ())),
                             preferred_element_type=jnp.float32, precision=hi)
    h1 = jnp.maximum(h1 + b1, 0.0)        # (15, tm) f32

    # Layers 2 & 3 stay entirely in f32 (intermediates never touch HBM).
    h2 = jnp.dot(w2, h1, preferred_element_type=jnp.float32, precision=hi)
    h2 = jnp.maximum(h2 + b2, 0.0)        # (8, tm) f32

    z = jnp.dot(w3, h2, preferred_element_type=jnp.float32, precision=hi) + b3
    e = jnp.exp(-jnp.abs(z))              # numerically stable sigmoid, f32
    o_ref[...] = jnp.where(z >= 0.0, 1.0 / (1.0 + e), e / (1.0 + e))


def _round_up(a, b):
    return (a + b - 1) // b * b


def pack_params(params):
    """Pack the 6 PyTorch-layout tensors into one resident f32 (32, 32) slab."""
    slab = jnp.zeros((SLAB_R, SLAB_C), jnp.float32)
    slab = slab.at[0:15, 0:30].set(params["w1"].astype(jnp.float32))
    slab = slab.at[0:15, 30].set(params["b1"].astype(jnp.float32))
    slab = slab.at[16:24, 0:15].set(params["w2"].astype(jnp.float32))
    slab = slab.at[16:24, 15].set(params["b2"].astype(jnp.float32))
    slab = slab.at[24, 0:8].set(params["w3"][0].astype(jnp.float32))
    slab = slab.at[24, 8].set(params["b3"][0].astype(jnp.float32))
    return slab


@functools.partial(jax.jit, static_argnames=("tm",))
def mlp_forward(x, params, *, tm=16384):
    """x: [B, 30] (f32 or bf16, passed through untouched).
    params: PyTorch-layout dict (w*: [out, in], b*: [out])."""
    B = x.shape[0]
    assert x.shape[1] == D_IN

    # Tile selection: biggest tile that covers B (amortizes ~0.35us/step),
    # never below the 128-lane minimum for the (1, tm) output block, and
    # capped so the grid keeps >= 2 steps once B >= 256 (v7x dual-TC sharding).
    tm_eff = max(128, min(_round_up(tm, 128), _round_up(B, 128)))
    if B >= 256:
        tm_eff = min(tm_eff, _round_up(pl.cdiv(B, 2), 128))
    grid = (pl.cdiv(B, tm_eff),)

    slab = pack_params(params)

    # Scoped-VMEM budget from the real (lane/sublane padded) double-buffered
    # footprint, capped below v7x's 64 MiB per-core VMEM.
    x_bytes = 2 * tm_eff * 128 * jnp.dtype(x.dtype).itemsize   # (tm, 30) pads to 128 lanes
    out_bytes = 2 * 8 * tm_eff * 4                             # (1, tm) f32 pads to 8 sublanes
    slab_bytes = 2 * SLAB_R * 128 * 4
    vmem_limit = int(min(max(x_bytes + out_bytes + slab_bytes + (2 << 20),
                             32 << 20), 48 << 20))

    out = pl.pallas_call(
        mlp_kernel,
        out_shape=jax.ShapeDtypeStruct((1, B), jnp.float32),
        grid_spec=pltpu.PrefetchScalarGridSpec(
            num_scalar_prefetch=0,
            grid=grid,
            in_specs=[
                pl.BlockSpec((tm_eff, D_IN), lambda i: (i, 0)),       # x batch tile
                pl.BlockSpec((SLAB_R, SLAB_C), lambda i: (0, 0)),     # resident params
            ],
            out_specs=pl.BlockSpec((1, tm_eff), lambda i: (0, i)),    # lane-dense out
        ),
        compiler_params=pltpu.CompilerParams(
            dimension_semantics=("parallel",),
            vmem_limit_bytes=vmem_limit,
        ),
    )(x, slab)

    return out[0].reshape(B, D_OUT)


def init_params(key):
    """PyTorch nn.Linear default init: U(-1/sqrt(fan_in), +1/sqrt(fan_in))."""
    ks = jax.random.split(key, 6)

    def lin(kw, kb, fan_in, fan_out):
        bound = float(fan_in) ** -0.5
        w = jax.random.uniform(kw, (fan_out, fan_in), jnp.float32, -bound, bound)
        b = jax.random.uniform(kb, (fan_out,), jnp.float32, -bound, bound)
        return w, b

    w1, b1 = lin(ks[0], ks[1], D_IN, D_H1)
    w2, b2 = lin(ks[2], ks[3], D_H1, D_H2)
    w3, b3 = lin(ks[4], ks[5], D_H2, D_OUT)
    return {"w1": w1, "b1": b1, "w2": w2, "b2": b2, "w3": w3, "b3": b3}


def mlp_reference(x, p):
    h1 = jnp.maximum(x @ p["w1"].T + p["b1"], 0.0)
    h2 = jnp.maximum(h1 @ p["w2"].T + p["b2"], 0.0)
    return jax.nn.sigmoid(h2 @ p["w3"].T + p["b3"])


if __name__ == "__main__":
    key = jax.random.PRNGKey(0)
    kp, kx, kx2 = jax.random.split(key, 3)

    params = init_params(kp)

    # Small batch: single partial block, ragged OOB lanes masked on store.
    x = jax.random.normal(kx, (16, D_IN), jnp.float32)
    ref = mlp_reference(x, params)
    out = jax.block_until_ready(mlp_forward(x, params))
    assert out.shape == (16, D_OUT)
    assert jnp.allclose(out, ref, atol=5e-3, rtol=0.0)

    # Bandwidth-saving caller contract: x already bf16 (params stay f32, so
    # the only extra error is input quantization).
    out_bf16 = jax.block_until_ready(mlp_forward(x.astype(jnp.bfloat16), params))
    assert out_bf16.shape == (16, D_OUT)
    assert jnp.allclose(out_bf16, ref, atol=2e-2, rtol=0.0)

    # Ragged multi-step grid: B=300 -> tm=256, 2 "parallel" steps, masked tail.
    x_big = jax.random.normal(kx2, (300, D_IN), jnp.float32)
    ref_big = mlp_reference(x_big, params)
    out_big = jax.block_until_ready(mlp_forward(x_big, params))
    assert out_big.shape == (300, D_OUT)
    assert jnp.allclose(out_big, ref_big, atol=5e-3, rtol=0.0)

    print("KERNEL_OK")
</pallas_src>

<mosaic_0001>
module attributes {stable_mosaic.version = 11 : i64} {
  func.func @mlp_kernel(%arg0: i32, %arg1: memref<128x30xf32, #tpu.memory_space<vmem>>, %arg2: memref<32x32xf32, #tpu.memory_space<vmem>>, %arg3: memref<1x128xf32, #tpu.memory_space<vmem>>) attributes {dimension_semantics = [#tpu.dimension_semantics<parallel>], iteration_bounds = array<i64: 1>, scalar_prefetch = 0 : i64, scratch_operands = 0 : i64, tpu.core_type = #tpu.core_type<tc>, window_params = [{transform_indices = @transform_0, window_bounds = array<i64: 128, 30>}, {pipeline_mode = #tpu.pipeline_mode<synchronous>, transform_indices = @transform_1, window_bounds = array<i64: 32, 32>}, {transform_indices = @transform_2, window_bounds = array<i64: 1, 128>}]} {
    %c0 = arith.constant 0 : index
    %c0_0 = arith.constant 0 : index
    %0 = vector.load %arg1[%c0, %c0_0] : memref<128x30xf32, #tpu.memory_space<vmem>>, vector<128x30xf32>
    %c0_1 = arith.constant 0 : index
    %c0_2 = arith.constant 0 : index
    %1 = vector.load %arg2[%c0_1, %c0_2] : memref<32x32xf32, #tpu.memory_space<vmem>>, vector<15x30xf32>
    %c0_3 = arith.constant 0 : index
    %c30 = arith.constant 30 : index
    %2 = vector.load %arg2[%c0_3, %c30] : memref<32x32xf32, #tpu.memory_space<vmem>>, vector<15x1xf32>
    %c16 = arith.constant 16 : index
    %c0_4 = arith.constant 0 : index
    %3 = vector.load %arg2[%c16, %c0_4] : memref<32x32xf32, #tpu.memory_space<vmem>>, vector<8x15xf32>
    %c16_5 = arith.constant 16 : index
    %c15 = arith.constant 15 : index
    %4 = vector.load %arg2[%c16_5, %c15] : memref<32x32xf32, #tpu.memory_space<vmem>>, vector<8x1xf32>
    %c24 = arith.constant 24 : index
    %c0_6 = arith.constant 0 : index
    %5 = vector.load %arg2[%c24, %c0_6] : memref<32x32xf32, #tpu.memory_space<vmem>>, vector<1x8xf32>
    %c24_7 = arith.constant 24 : index
    %c8 = arith.constant 8 : index
    %6 = vector.load %arg2[%c24_7, %c8] : memref<32x32xf32, #tpu.memory_space<vmem>>, vector<1x1xf32>
    %cst = arith.constant dense<0.000000e+00> : vector<15x128xf32>
    %7 = tpu.matmul %1, %0, %cst {dimension_numbers = #tpu.dot_dimension_numbers<[1], [1], [0], [0], [0, 0, 1, 0], [], []>, precision = #tpu.contract_precision<fp32>} : vector<15x30xf32>, vector<128x30xf32>, vector<15x128xf32> -> vector<15x128xf32>
    %8 = vector.broadcast %2 : vector<15x1xf32> to vector<15x128xf32>
    %9 = arith.addf %7, %8 : vector<15x128xf32>
    %cst_8 = arith.constant 0.000000e+00 : f32
    %10 = vector.broadcast %cst_8 : f32 to vector<15x128xf32>
    %11 = arith.maximumf %9, %10 : vector<15x128xf32>
    %cst_9 = arith.constant dense<0.000000e+00> : vector<8x128xf32>
    %12 = tpu.matmul %3, %11, %cst_9 {dimension_numbers = #tpu.dot_dimension_numbers<[1], [0], [0], [1], [0, 0, 1, 1], [], []>, precision = #tpu.contract_precision<fp32>} : vector<8x15xf32>, vector<15x128xf32>, vector<8x128xf32> -> vector<8x128xf32>
    %13 = vector.broadcast %4 : vector<8x1xf32> to vector<8x128xf32>
    %14 = arith.addf %12, %13 : vector<8x128xf32>
    %cst_10 = arith.constant 0.000000e+00 : f32
    %15 = vector.broadcast %cst_10 : f32 to vector<8x128xf32>
    %16 = arith.maximumf %14, %15 : vector<8x128xf32>
    %cst_11 = arith.constant dense<0.000000e+00> : vector<1x128xf32>
    %17 = tpu.matmul %5, %16, %cst_11 {dimension_numbers = #tpu.dot_dimension_numbers<[1], [0], [0], [1], [0, 0, 1, 1], [], []>, precision = #tpu.contract_precision<fp32>} : vector<1x8xf32>, vector<8x128xf32>, vector<1x128xf32> -> vector<1x128xf32>
    %18 = vector.broadcast %6 : vector<1x1xf32> to vector<1x128xf32>
    %19 = arith.addf %17, %18 : vector<1x128xf32>
    %20 = math.absf %19 : vector<1x128xf32>
    %cst_12 = arith.constant 0.000000e+00 : f32
    %21 = vector.broadcast %cst_12 : f32 to vector<1x128xf32>
    %22 = arith.subf %21, %20 : vector<1x128xf32>
    %23 = math.exp %22 : vector<1x128xf32>
    %cst_13 = arith.constant 0.000000e+00 : f32
    %24 = vector.broadcast %cst_13 : f32 to vector<1x128xf32>
    %25 = arith.cmpf oge, %19, %24 : vector<1x128xf32>
    %cst_14 = arith.constant 1.000000e+00 : f32
    %26 = vector.broadcast %cst_14 : f32 to vector<1x128xf32>
    %27 = arith.addf %26, %23 : vector<1x128xf32>
    %cst_15 = arith.constant 1.000000e+00 : f32
    %28 = vector.broadcast %cst_15 : f32 to vector<1x128xf32>
    %29 = arith.divf %28, %27 : vector<1x128xf32>
    %cst_16 = arith.constant 1.000000e+00 : f32
    %30 = vector.broadcast %cst_16 : f32 to vector<1x128xf32>
    %31 = arith.addf %30, %23 : vector<1x128xf32>
    %32 = arith.divf %23, %31 : vector<1x128xf32>
    %33 = arith.select %25, %29, %32 : vector<1x128xi1>, vector<1x128xf32>
    %c0_17 = arith.constant 0 : index
    %c0_18 = arith.constant 0 : index
    %34 = vector.load %arg3[%c0_17, %c0_18] : memref<1x128xf32, #tpu.memory_space<vmem>>, vector<1x128xf32>
    tpu.vector_store %arg3[%c0_17, %c0_18], %33 {strides = array<i32>} : memref<1x128xf32, #tpu.memory_space<vmem>>, vector<1x128xf32>,
    return
  }
  func.func @transform_0(%arg0: i32) -> (i32, i32) {
    %c0_i32 = arith.constant 0 : i32
    %c0_i32_0 = arith.constant 0 : i32
    return %arg0, %c0_i32 : i32, i32
  }
  func.func @transform_1(%arg0: i32) -> (i32, i32) {
    %c0_i32 = arith.constant 0 : i32
    %c0_i32_0 = arith.constant 0 : i32
    %c0_i32_1 = arith.constant 0 : i32
    return %c0_i32, %c0_i32_0 : i32, i32
  }
  func.func @transform_2(%arg0: i32) -> (i32, i32) {
    %c0_i32 = arith.constant 0 : i32
    %c0_i32_0 = arith.constant 0 : i32
    return %c0_i32, %arg0 : i32, i32
  }
}

</mosaic_0001>

<llo_original>
// kernel: mlp_forward.1
$region0: #{mlp_forward.1}
  #allocation0 [shape = 'u32[]', space=smem, size = 0x4, offset = 0x4, fixed_abs, tag = 'smem constant byte address 0x4 - core index']
  #allocation1 [shape = 'u32[72,128]{1,0:T(1,128)}', space=vmem, size = 0x9000, scoped, tag = 'internal scratch']
  %s0 = inlined_call_operand.vmem [shape: f32[16,30], index: 0, kind: input, shape index: {}]
  %s1 = inlined_call_operand.vmem [shape: f32[32,32], index: 1, kind: input, shape index: {}]
  %s2 = inlined_call_operand.hbm [shape: f32[1,16], index: 2, kind: output, shape index: {}]
  %s3 = sld [smem:[#allocation0]]
  $region18: #{mlp_forward.1} parent=0
    _
  %s5 = ssub.s32 1, %s3
  %s6 = scalar_select 0, %s5, %s3
  $region1: #{mlp_forward.1} parent=0
    #allocation2 [shape = 'u8[512]{0}', space=vmem, size = 0x400, scoped, tag = 'output window, operand 0, single buffered']
    #allocation3 [shape = 's32[1]{0}', space=sflag, size = 0x4, scoped, tag = 'scoped memory for mlp_forward.1']
    %7 = vsyncpa [#allocation3], 0
    // Predicated region
    $region2: #{mlp_forward.1} parent=1 // pred_check
      _
    $region3: #{mlp_forward.1} parent=1 // pred_check_branch
      %9 = sbr.rel (0) target = $region5
    $region4: #{mlp_forward.1} parent=1 // pred_region
      _
    $region5: #{mlp_forward.1} parent=1 // pred_fallthru
      _
    // Predicated region
    $region6: #{mlp_forward.1} parent=1 // pred_check
      _
    $region7: #{mlp_forward.1} parent=1 // pred_check_branch
      %11 = sbr.rel (0) target = $region9
    $region8: #{mlp_forward.1} parent=1 // pred_region
      _
    $region9: #{mlp_forward.1} parent=1 // pred_fallthru
      _
    %v12 = vld [vmem:[%s0] sm:$0xff]
    %v13 = vld [vmem:[%s0 + $0x8] sm:$0xff]
    %v14 = vld [vmem:[%s0 + $0x10] sm:$0xff]
    %v15 = vld [vmem:[%s0 + $0x18] sm:$0xff]
    %v16 = vld [vmem:[%s0 + $0x20] sm:$0xff]
    %v17 = vld [vmem:[%s0 + $0x28] sm:$0xff]
    %v18 = vld [vmem:[%s0 + $0x30] sm:$0xff]
    %v19 = vld [vmem:[%s0 + $0x38] sm:$0xff]
    %v20 = vld [vmem:[%s0 + $0x40] sm:$0xff]
    %v21 = vld [vmem:[%s0 + $0x48] sm:$0xff]
    %v22 = vld [vmem:[%s0 + $0x50] sm:$0xff]
    %v23 = vld [vmem:[%s0 + $0x58] sm:$0xff]
    %v24 = vld [vmem:[%s0 + $0x60] sm:$0xff]
    %v25 = vld [vmem:[%s0 + $0x68] sm:$0xff]
    %v26 = vld [vmem:[%s0 + $0x70] sm:$0xff]
    %v27 = vld [vmem:[%s0 + $0x78] sm:$0xff]
    %v28 = vld [vmem:[%s1] sm:$0xff]
    %v29 = vld [vmem:[%s1 + $0x8] sm:$0x7f]
    %v30 = vld [vmem:[%s1 + $0x10] sm:$0xff]
    %v31 = vld [vmem:[%s1 + $0x18] sm:$0x1]
    %33 = vset.pattern.permute.xlu0 30
    %34 = vperm.xlu0 %33, %v28
    %v35 = vpop.permute.xlu0 %34
    %38 = vset.pattern.permute.xlu0 30
    %39 = vperm.xlu0 %38, %v29
    %v40 = vpop.permute.xlu0 %39
    %vm42 = vcmask 244736
    %v43 = vsel %vm42, %v28, 0
    %v45 = vsel %vm42, %v29, 0
    %v48 = vsel %vm42, %v12, 0
    %v51 = vsel %vm42, %v13, 0
    %v54 = vsel %vm42, %v14, 0
    %v57 = vsel %vm42, %v15, 0
    %v60 = vsel %vm42, %v16, 0
    %v63 = vsel %vm42, %v17, 0
    %v66 = vsel %vm42, %v18, 0
    %v69 = vsel %vm42, %v19, 0
    %v72 = vsel %vm42, %v20, 0
    %v75 = vsel %vm42, %v21, 0
    %v78 = vsel %vm42, %v22, 0
    %v81 = vsel %vm42, %v23, 0
    %v84 = vsel %vm42, %v24, 0
    %v87 = vsel %vm42, %v25, 0
    %v90 = vsel %vm42, %v26, 0
    %v93 = vsel %vm42, %v27, 0
    %v95 = vand.u32 %v93, 4294901760
    %96 = vmatpush.xpose.msra.mxu0 %v95
    %v97 = vand.u32 %v90, 4294901760
    %98 = vmatpush.xpose.msra.mxu0 %v97
    %v99 = vand.u32 %v87, 4294901760
    %100 = vmatpush.xpose.msra.mxu0 %v99
    %v101 = vand.u32 %v84, 4294901760
    %102 = vmatpush.xpose.msra.mxu0 %v101
    %v103 = vand.u32 %v81, 4294901760
    %104 = vmatpush.xpose.msra.mxu0 %v103
    %v105 = vand.u32 %v78, 4294901760
    %106 = vmatpush.xpose.msra.mxu0 %v105
    %v107 = vand.u32 %v75, 4294901760
    %108 = vmatpush.xpose.msra.mxu0 %v107
    %v109 = vand.u32 %v72, 4294901760
    %110 = vmatpush.xpose.msra.mxu0 %v109
    %v111 = vand.u32 %v69, 4294901760
    %112 = vmatpush.xpose.msra.mxu0 %v111
    %v113 = vand.u32 %v66, 4294901760
    %114 = vmatpush.xpose.msra.mxu0 %v113
    %v115 = vand.u32 %v63, 4294901760
    %116 = vmatpush.xpose.msra.mxu0 %v115
    %v117 = vand.u32 %v60, 4294901760
    %118 = vmatpush.xpose.msra.mxu0 %v117
    %v119 = vand.u32 %v57, 4294901760
    %120 = vmatpush.xpose.msra.mxu0 %v119
    %v121 = vand.u32 %v54, 4294901760
    %122 = vmatpush.xpose.msra.mxu0 %v121
    %v123 = vand.u32 %v51, 4294901760
    %124 = vmatpush.xpose.msra.mxu0 %v123
    %v125 = vand.u32 %v48, 4294901760
    %126 = vmatpush.xpose.msra.mxu0 %v125
    %v127 = vand.u32 %v43, 4294901760
    %v128 = vsub.f32 %v43, %v127
    %v129 = vand.u32 %v128, 4294901760
    %v130 = vsub.f32 %v128, %v129
    %v131 = vand.u32 %v130, 4294901760
    %132 = vmatmul.f32.gmra.mxu0 %v131
    %v133 = vpop.f32.mrf.mxu0
    %v134 = vadd.f32 %v35, %v133
    %v135 = vand.u32 %v45, 4294901760
    %v136 = vsub.f32 %v45, %v135
    %v137 = vand.u32 %v136, 4294901760
    %v138 = vsub.f32 %v136, %v137
    %v139 = vand.u32 %v138, 4294901760
    %140 = vmatmul.f32.gmra.mxu0 %v139
    %v141 = vpop.f32.mrf.mxu0
    %v142 = vadd.f32 %v40, %v141
    %143 = vdwg.mxu0
    %v144 = vand.u32 %v93, 4294901760
    %v145 = vsub.f32 %v93, %v144
    %v146 = vand.u32 %v145, 4294901760
    %v147 = vsub.f32 %v145, %v146
    %v148 = vand.u32 %v147, 4294901760
    %149 = vmatpush.xpose.msra.mxu0 %v148
    %v150 = vand.u32 %v90, 4294901760
    %v151 = vsub.f32 %v90, %v150
    %v152 = vand.u32 %v151, 4294901760
    %v153 = vsub.f32 %v151, %v152
    %v154 = vand.u32 %v153, 4294901760
    %155 = vmatpush.xpose.msra.mxu0 %v154
    %v156 = vand.u32 %v87, 4294901760
    %v157 = vsub.f32 %v87, %v156
    %v158 = vand.u32 %v157, 4294901760
    %v159 = vsub.f32 %v157, %v158
    %v160 = vand.u32 %v159, 4294901760
    %161 = vmatpush.xpose.msra.mxu0 %v160
    %v162 = vand.u32 %v84, 4294901760
    %v163 = vsub.f32 %v84, %v162
    %v164 = vand.u32 %v163, 4294901760
    %v165 = vsub.f32 %v163, %v164
    %v166 = vand.u32 %v165, 4294901760
    %167 = vmatpush.xpose.msra.mxu0 %v166
    %v168 = vand.u32 %v81, 4294901760
    %v169 = vsub.f32 %v81, %v168
    %v170 = vand.u32 %v169, 4294901760
    %v171 = vsub.f32 %v169, %v170
    %v172 = vand.u32 %v171, 4294901760
    %173 = vmatpush.xpose.msra.mxu0 %v172
    %v174 = vand.u32 %v78, 4294901760
    %v175 = vsub.f32 %v78, %v174
    %v176 = vand.u32 %v175, 4294901760
    %v177 = vsub.f32 %v175, %v176
    %v178 = vand.u32 %v177, 4294901760
    %179 = vmatpush.xpose.msra.mxu0 %v178
    %v180 = vand.u32 %v75, 4294901760
    %v181 = vsub.f32 %v75, %v180
    %v182 = vand.u32 %v181, 4294901760
    %v183 = vsub.f32 %v181, %v182
    %v184 = vand.u32 %v183, 4294901760
    %185 = vmatpush.xpose.msra.mxu0 %v184
    %v186 = vand.u32 %v72, 4294901760
    %v187 = vsub.f32 %v72, %v186
    %v188 = vand.u32 %v187, 4294901760
    %v189 = vsub.f32 %v187, %v188
    %v190 = vand.u32 %v189, 4294901760
    %191 = vmatpush.xpose.msra.mxu0 %v190
    %v192 = vand.u32 %v69, 4294901760
    %v193 = vsub.f32 %v69, %v192
    %v194 = vand.u32 %v193, 4294901760
    %v195 = vsub.f32 %v193, %v194
    %v196 = vand.u32 %v195, 4294901760
    %197 = vmatpush.xpose.msra.mxu0 %v196
    %v198 = vand.u32 %v66, 4294901760
    %v199 = vsub.f32 %v66, %v198
    %v200 = vand.u32 %v199, 4294901760
    %v201 = vsub.f32 %v199, %v200
    %v202 = vand.u32 %v201, 4294901760
    %203 = vmatpush.xpose.msra.mxu0 %v202
    %v204 = vand.u32 %v63, 4294901760
    %v205 = vsub.f32 %v63, %v204
    %v206 = vand.u32 %v205, 4294901760
    %v207 = vsub.f32 %v205, %v206
    %v208 = vand.u32 %v207, 4294901760
    %209 = vmatpush.xpose.msra.mxu0 %v208
    %v210 = vand.u32 %v60, 4294901760
    %v211 = vsub.f32 %v60, %v210
    %v212 = vand.u32 %v211, 4294901760
    %v213 = vsub.f32 %v211, %v212
    %v214 = vand.u32 %v213, 4294901760
    %215 = vmatpush.xpose.msra.mxu0 %v214
    %v216 = vand.u32 %v57, 4294901760
    %v217 = vsub.f32 %v57, %v216
    %v218 = vand.u32 %v217, 4294901760
    %v219 = vsub.f32 %v217, %v218
    %v220 = vand.u32 %v219, 4294901760
    %221 = vmatpush.xpose.msra.mxu0 %v220
    %v222 = vand.u32 %v54, 4294901760
    %v223 = vsub.f32 %v54, %v222
    %v224 = vand.u32 %v223, 4294901760
    %v225 = vsub.f32 %v223, %v224
    %v226 = vand.u32 %v225, 4294901760
    %227 = vmatpush.xpose.msra.mxu0 %v226
    %v228 = vand.u32 %v51, 4294901760
    %v229 = vsub.f32 %v51, %v228
    %v230 = vand.u32 %v229, 4294901760
    %v231 = vsub.f32 %v229, %v230
    %v232 = vand.u32 %v231, 4294901760
    %233 = vmatpush.xpose.msra.mxu0 %v232
    %v234 = vand.u32 %v48, 4294901760
    %v235 = vsub.f32 %v48, %v234
    %v236 = vand.u32 %v235, 4294901760
    %v237 = vsub.f32 %v235, %v236
    %v238 = vand.u32 %v237, 4294901760
    %239 = vmatpush.xpose.msra.mxu0 %v238
    %v240 = vand.u32 %v43, 4294901760
    %241 = vmatmul.f32.gmra.mxu0 %v240
    %v242 = vpop.f32.mrf.mxu0
    %v243 = vadd.f32 %v134, %v242
    %v244 = vand.u32 %v45, 4294901760
    %245 = vmatmul.f32.gmra.mxu0 %v244
    %v246 = vpop.f32.mrf.mxu0
    %v247 = vadd.f32 %v142, %v246
    %248 = vdwg.mxu0
    %v249 = vand.u32 %v93, 4294901760
    %v250 = vsub.f32 %v93, %v249
    %251 = vmatpush.xpose.msra.mxu0 %v250
    %v252 = vand.u32 %v90, 4294901760
    %v253 = vsub.f32 %v90, %v252
    %254 = vmatpush.xpose.msra.mxu0 %v253
    %v255 = vand.u32 %v87, 4294901760
    %v256 = vsub.f32 %v87, %v255
    %257 = vmatpush.xpose.msra.mxu0 %v256
    %v258 = vand.u32 %v84, 4294901760
    %v259 = vsub.f32 %v84, %v258
    %260 = vmatpush.xpose.msra.mxu0 %v259
    %v261 = vand.u32 %v81, 4294901760
    %v262 = vsub.f32 %v81, %v261
    %263 = vmatpush.xpose.msra.mxu0 %v262
    %v264 = vand.u32 %v78, 4294901760
    %v265 = vsub.f32 %v78, %v264
    %266 = vmatpush.xpose.msra.mxu0 %v265
    %v267 = vand.u32 %v75, 4294901760
    %v268 = vsub.f32 %v75, %v267
    %269 = vmatpush.xpose.msra.mxu0 %v268
    %v270 = vand.u32 %v72, 4294901760
    %v271 = vsub.f32 %v72, %v270
    %272 = vmatpush.xpose.msra.mxu0 %v271
    %v273 = vand.u32 %v69, 4294901760
    %v274 = vsub.f32 %v69, %v273
    %275 = vmatpush.xpose.msra.mxu0 %v274
    %v276 = vand.u32 %v66, 4294901760
    %v277 = vsub.f32 %v66, %v276
    %278 = vmatpush.xpose.msra.mxu0 %v277
    %v279 = vand.u32 %v63, 4294901760
    %v280 = vsub.f32 %v63, %v279
    %281 = vmatpush.xpose.msra.mxu0 %v280
    %v282 = vand.u32 %v60, 4294901760
    %v283 = vsub.f32 %v60, %v282
    %284 = vmatpush.xpose.msra.mxu0 %v283
    %v285 = vand.u32 %v57, 4294901760
    %v286 = vsub.f32 %v57, %v285
    %287 = vmatpush.xpose.msra.mxu0 %v286
    %v288 = vand.u32 %v54, 4294901760
    %v289 = vsub.f32 %v54, %v288
    %290 = vmatpush.xpose.msra.mxu0 %v289
    %v291 = vand.u32 %v51, 4294901760
    %v292 = vsub.f32 %v51, %v291
    %293 = vmatpush.xpose.msra.mxu0 %v292
    %v294 = vand.u32 %v48, 4294901760
    %v295 = vsub.f32 %v48, %v294
    %296 = vmatpush.xpose.msra.mxu0 %v295
    %v297 = vand.u32 %v43, 4294901760
    %v298 = vsub.f32 %v43, %v297
    %299 = vmatmul.f32.gmra.mxu0 %v298
    %v300 = vpop.f32.mrf.mxu0
    %v301 = vadd.f32 %v243, %v300
    %v302 = vand.u32 %v45, 4294901760
    %v303 = vsub.f32 %v45, %v302
    %304 = vmatmul.f32.gmra.mxu0 %v303
    %v305 = vpop.f32.mrf.mxu0
    %v306 = vadd.f32 %v247, %v305
    %307 = vdwg.mxu0
    %v308 = vand.u32 %v93, 4294901760
    %309 = vmatpush.xpose.msra.mxu0 %v308
    %v310 = vand.u32 %v90, 4294901760
    %311 = vmatpush.xpose.msra.mxu0 %v310
    %v312 = vand.u32 %v87, 4294901760
    %313 = vmatpush.xpose.msra.mxu0 %v312
    %v314 = vand.u32 %v84, 4294901760
    %315 = vmatpush.xpose.msra.mxu0 %v314
    %v316 = vand.u32 %v81, 4294901760
    %317 = vmatpush.xpose.msra.mxu0 %v316
    %v318 = vand.u32 %v78, 4294901760
    %319 = vmatpush.xpose.msra.mxu0 %v318
    %v320 = vand.u32 %v75, 4294901760
    %321 = vmatpush.xpose.msra.mxu0 %v320
    %v322 = vand.u32 %v72, 4294901760
    %323 = vmatpush.xpose.msra.mxu0 %v322
    %v324 = vand.u32 %v69, 4294901760
    %325 = vmatpush.xpose.msra.mxu0 %v324
    %v326 = vand.u32 %v66, 4294901760
    %327 = vmatpush.xpose.msra.mxu0 %v326
    %v328 = vand.u32 %v63, 4294901760
    %329 = vmatpush.xpose.msra.mxu0 %v328
    %v330 = vand.u32 %v60, 4294901760
    %331 = vmatpush.xpose.msra.mxu0 %v330
    %v332 = vand.u32 %v57, 4294901760
    %333 = vmatpush.xpose.msra.mxu0 %v332
    %v334 = vand.u32 %v54, 4294901760
    %335 = vmatpush.xpose.msra.mxu0 %v334
    %v336 = vand.u32 %v51, 4294901760
    %337 = vmatpush.xpose.msra.mxu0 %v336
    %v338 = vand.u32 %v48, 4294901760
    %339 = vmatpush.xpose.msra.mxu0 %v338
    %v340 = vand.u32 %v43, 4294901760
    %v341 = vsub.f32 %v43, %v340
    %v342 = vand.u32 %v341, 4294901760
    %343 = vmatmul.f32.gmra.mxu0 %v342
    %v344 = vpop.f32.mrf.mxu0
    %v345 = vadd.f32 %v301, %v344
    %v346 = vand.u32 %v45, 4294901760
    %v347 = vsub.f32 %v45, %v346
    %v348 = vand.u32 %v347, 4294901760
    %349 = vmatmul.f32.gmra.mxu0 %v348
    %v350 = vpop.f32.mrf.mxu0
    %v351 = vadd.f32 %v306, %v350
    %352 = vdwg.mxu0
    %v353 = vand.u32 %v93, 4294901760
    %v354 = vsub.f32 %v93, %v353
    %v355 = vand.u32 %v354, 4294901760
    %356 = vmatpush.xpose.msra.mxu0 %v355
    %v357 = vand.u32 %v90, 4294901760
    %v358 = vsub.f32 %v90, %v357
    %v359 = vand.u32 %v358, 4294901760
    %360 = vmatpush.xpose.msra.mxu0 %v359
    %v361 = vand.u32 %v87, 4294901760
    %v362 = vsub.f32 %v87, %v361
    %v363 = vand.u32 %v362, 4294901760
    %364 = vmatpush.xpose.msra.mxu0 %v363
    %v365 = vand.u32 %v84, 4294901760
    %v366 = vsub.f32 %v84, %v365
    %v367 = vand.u32 %v366, 4294901760
    %368 = vmatpush.xpose.msra.mxu0 %v367
    %v369 = vand.u32 %v81, 4294901760
    %v370 = vsub.f32 %v81, %v369
    %v371 = vand.u32 %v370, 4294901760
    %372 = vmatpush.xpose.msra.mxu0 %v371
    %v373 = vand.u32 %v78, 4294901760
    %v374 = vsub.f32 %v78, %v373
    %v375 = vand.u32 %v374, 4294901760
    %376 = vmatpush.xpose.msra.mxu0 %v375
    %v377 = vand.u32 %v75, 4294901760
    %v378 = vsub.f32 %v75, %v377
    %v379 = vand.u32 %v378, 4294901760
    %380 = vmatpush.xpose.msra.mxu0 %v379
    %v381 = vand.u32 %v72, 4294901760
    %v382 = vsub.f32 %v72, %v381
    %v383 = vand.u32 %v382, 4294901760
    %384 = vmatpush.xpose.msra.mxu0 %v383
    %v385 = vand.u32 %v69, 4294901760
    %v386 = vsub.f32 %v69, %v385
    %v387 = vand.u32 %v386, 4294901760
    %388 = vmatpush.xpose.msra.mxu0 %v387
    %v389 = vand.u32 %v66, 4294901760
    %v390 = vsub.f32 %v66, %v389
    %v391 = vand.u32 %v390, 4294901760
    %392 = vmatpush.xpose.msra.mxu0 %v391
    %v393 = vand.u32 %v63, 4294901760
    %v394 = vsub.f32 %v63, %v393
    %v395 = vand.u32 %v394, 4294901760
    %396 = vmatpush.xpose.msra.mxu0 %v395
    %v397 = vand.u32 %v60, 4294901760
    %v398 = vsub.f32 %v60, %v397
    %v399 = vand.u32 %v398, 4294901760
    %400 = vmatpush.xpose.msra.mxu0 %v399
    %v401 = vand.u32 %v57, 4294901760
    %v402 = vsub.f32 %v57, %v401
    %v403 = vand.u32 %v402, 4294901760
    %404 = vmatpush.xpose.msra.mxu0 %v403
    %v405 = vand.u32 %v54, 4294901760
    %v406 = vsub.f32 %v54, %v405
    %v407 = vand.u32 %v406, 4294901760
    %408 = vmatpush.xpose.msra.mxu0 %v407
    %v409 = vand.u32 %v51, 4294901760
    %v410 = vsub.f32 %v51, %v409
    %v411 = vand.u32 %v410, 4294901760
    %412 = vmatpush.xpose.msra.mxu0 %v411
    %v413 = vand.u32 %v48, 4294901760
    %v414 = vsub.f32 %v48, %v413
    %v415 = vand.u32 %v414, 4294901760
    %416 = vmatpush.xpose.msra.mxu0 %v415
    %v417 = vand.u32 %v43, 4294901760
    %418 = vmatmul.f32.gmra.mxu0 %v417
    %v419 = vpop.f32.mrf.mxu0
    %v420 = vadd.f32 %v345, %v419
    %v421 = vand.u32 %v45, 4294901760
    %422 = vmatmul.f32.gmra.mxu0 %v421
    %v423 = vpop.f32.mrf.mxu0
    %v424 = vadd.f32 %v351, %v423
    %425 = vdwg.mxu0
    %v426 = vand.u32 %v93, 4294901760
    %427 = vmatpush.xpose.msra.mxu0 %v426
    %v428 = vand.u32 %v90, 4294901760
    %429 = vmatpush.xpose.msra.mxu0 %v428
    %v430 = vand.u32 %v87, 4294901760
    %431 = vmatpush.xpose.msra.mxu0 %v430
    %v432 = vand.u32 %v84, 4294901760
    %433 = vmatpush.xpose.msra.mxu0 %v432
    %v434 = vand.u32 %v81, 4294901760
    %435 = vmatpush.xpose.msra.mxu0 %v434
    %v436 = vand.u32 %v78, 4294901760
    %437 = vmatpush.xpose.msra.mxu0 %v436
    %v438 = vand.u32 %v75, 4294901760
    %439 = vmatpush.xpose.msra.mxu0 %v438
    %v440 = vand.u32 %v72, 4294901760
    %441 = vmatpush.xpose.msra.mxu0 %v440
    %v442 = vand.u32 %v69, 4294901760
    %443 = vmatpush.xpose.msra.mxu0 %v442
    %v444 = vand.u32 %v66, 4294901760
    %445 = vmatpush.xpose.msra.mxu0 %v444
    %v446 = vand.u32 %v63, 4294901760
    %447 = vmatpush.xpose.msra.mxu0 %v446
    %v448 = vand.u32 %v60, 4294901760
    %449 = vmatpush.xpose.msra.mxu0 %v448
    %v450 = vand.u32 %v57, 4294901760
    %451 = vmatpush.xpose.msra.mxu0 %v450
    %v452 = vand.u32 %v54, 4294901760
    %453 = vmatpush.xpose.msra.mxu0 %v452
    %v454 = vand.u32 %v51, 4294901760
    %455 = vmatpush.xpose.msra.mxu0 %v454
    %v456 = vand.u32 %v48, 4294901760
    %457 = vmatpush.xpose.msra.mxu0 %v456
    %v458 = vand.u32 %v43, 4294901760
    %459 = vmatmul.f32.gmra.mxu0 %v458
    %v460 = vpop.f32.mrf.mxu0
    %v461 = vadd.f32 %v420, %v460
    %v462 = vand.u32 %v45, 4294901760
    %463 = vmatmul.f32.gmra.mxu0 %v462
    %v464 = vpop.f32.mrf.mxu0
    %v465 = vadd.f32 %v424, %v464
    %466 = vdwg.mxu0
    %v467 = vmax.f32 %v461, 0.0
    %v468 = vmax.f32 %v465, 0.0
    %470 = vset.pattern.permute.xlu0 15
    %471 = vperm.xlu0 %470, %v30
    %v472 = vpop.permute.xlu0 %471
    %vm474 = vcmask 121856
    %v475 = vsel %vm474, %v30, 0
    %vm477 = vcmask 1046528
    %v479 = vsel %vm477, %v468, 0
    %481 = vmatpush.msra.mxu0 0.0
    %482 = vmatpush.msra.mxu0 0.0
    %483 = vmatpush.msra.mxu0 0.0
    %484 = vmatpush.msra.mxu0 0.0
    %485 = vmatpush.msra.mxu0 0.0
    %486 = vmatpush.msra.mxu0 0.0
    %487 = vmatpush.msra.mxu0 0.0
    %488 = vmatpush.msra.mxu0 0.0
    %489 = vmatpush.msra.mxu0 0.0
    %490 = vmatpush.msra.mxu0 0.0
    %491 = vmatpush.msra.mxu0 0.0
    %492 = vmatpush.msra.mxu0 0.0
    %493 = vmatpush.msra.mxu0 0.0
    %494 = vmatpush.msra.mxu0 0.0
    %v495 = vand.u32 %v479, 4294901760
    %496 = vmatpush.msra.mxu0 %v495
    %v497 = vand.u32 %v467, 4294901760
    %498 = vmatpush.msra.mxu0 %v497
    %v499 = vand.u32 %v475, 4294901760
    %v500 = vsub.f32 %v475, %v499
    %v501 = vand.u32 %v500, 4294901760
    %v502 = vsub.f32 %v500, %v501
    %v503 = vand.u32 %v502, 4294901760
    %504 = vmatmul.f32.gmra.mxu0 %v503
    %v505 = vpop.f32.mrf.mxu0
    %v506 = vadd.f32 %v472, %v505
    %507 = vdwg.mxu0
    %508 = vmatpush.msra.mxu0 0.0
    %509 = vmatpush.msra.mxu0 0.0
    %510 = vmatpush.msra.mxu0 0.0
    %511 = vmatpush.msra.mxu0 0.0
    %512 = vmatpush.msra.mxu0 0.0
    %513 = vmatpush.msra.mxu0 0.0
    %514 = vmatpush.msra.mxu0 0.0
    %515 = vmatpush.msra.mxu0 0.0
    %516 = vmatpush.msra.mxu0 0.0
    %517 = vmatpush.msra.mxu0 0.0
    %518 = vmatpush.msra.mxu0 0.0
    %519 = vmatpush.msra.mxu0 0.0
    %520 = vmatpush.msra.mxu0 0.0
    %521 = vmatpush.msra.mxu0 0.0
    %v522 = vand.u32 %v479, 4294901760
    %v523 = vsub.f32 %v479, %v522
    %v524 = vand.u32 %v523, 4294901760
    %v525 = vsub.f32 %v523, %v524
    %v526 = vand.u32 %v525, 4294901760
    %527 = vmatpush.msra.mxu0 %v526
    %v528 = vand.u32 %v467, 4294901760
    %v529 = vsub.f32 %v467, %v528
    %v530 = vand.u32 %v529, 4294901760
    %v531 = vsub.f32 %v529, %v530
    %v532 = vand.u32 %v531, 4294901760
    %533 = vmatpush.msra.mxu0 %v532
    %v534 = vand.u32 %v475, 4294901760
    %535 = vmatmul.f32.gmra.mxu0 %v534
    %v536 = vpop.f32.mrf.mxu0
    %v537 = vadd.f32 %v506, %v536
    %538 = vdwg.mxu0
    %539 = vmatpush.msra.mxu0 0.0
    %540 = vmatpush.msra.mxu0 0.0
    %541 = vmatpush.msra.mxu0 0.0
    %542 = vmatpush.msra.mxu0 0.0
    %543 = vmatpush.msra.mxu0 0.0
    %544 = vmatpush.msra.mxu0 0.0
    %545 = vmatpush.msra.mxu0 0.0
    %546 = vmatpush.msra.mxu0 0.0
    %547 = vmatpush.msra.mxu0 0.0
    %548 = vmatpush.msra.mxu0 0.0
    %549 = vmatpush.msra.mxu0 0.0
    %550 = vmatpush.msra.mxu0 0.0
    %551 = vmatpush.msra.mxu0 0.0
    %552 = vmatpush.msra.mxu0 0.0
    %v553 = vand.u32 %v479, 4294901760
    %v554 = vsub.f32 %v479, %v553
    %555 = vmatpush.msra.mxu0 %v554
    %v556 = vand.u32 %v467, 4294901760
    %v557 = vsub.f32 %v467, %v556
    %558 = vmatpush.msra.mxu0 %v557
    %v559 = vand.u32 %v475, 4294901760
    %v560 = vsub.f32 %v475, %v559
    %561 = vmatmul.f32.gmra.mxu0 %v560
    %v562 = vpop.f32.mrf.mxu0
    %v563 = vadd.f32 %v537, %v562
    %564 = vdwg.mxu0
    %565 = vmatpush.msra.mxu0 0.0
    %566 = vmatpush.msra.mxu0 0.0
    %567 = vmatpush.msra.mxu0 0.0
    %568 = vmatpush.msra.mxu0 0.0
    %569 = vmatpush.msra.mxu0 0.0
    %570 = vmatpush.msra.mxu0 0.0
    %571 = vmatpush.msra.mxu0 0.0
    %572 = vmatpush.msra.mxu0 0.0
    %573 = vmatpush.msra.mxu0 0.0
    %574 = vmatpush.msra.mxu0 0.0
    %575 = vmatpush.msra.mxu0 0.0
    %576 = vmatpush.msra.mxu0 0.0
    %577 = vmatpush.msra.mxu0 0.0
    %578 = vmatpush.msra.mxu0 0.0
    %v579 = vand.u32 %v479, 4294901760
    %580 = vmatpush.msra.mxu0 %v579
    %v581 = vand.u32 %v467, 4294901760
    %582 = vmatpush.msra.mxu0 %v581
    %v583 = vand.u32 %v475, 4294901760
    %v584 = vsub.f32 %v475, %v583
    %v585 = vand.u32 %v584, 4294901760
    %586 = vmatmul.f32.gmra.mxu0 %v585
    %v587 = vpop.f32.mrf.mxu0
    %v588 = vadd.f32 %v563, %v587
    %589 = vdwg.mxu0
    %590 = vmatpush.msra.mxu0 0.0
    %591 = vmatpush.msra.mxu0 0.0
    %592 = vmatpush.msra.mxu0 0.0
    %593 = vmatpush.msra.mxu0 0.0
    %594 = vmatpush.msra.mxu0 0.0
    %595 = vmatpush.msra.mxu0 0.0
    %596 = vmatpush.msra.mxu0 0.0
    %597 = vmatpush.msra.mxu0 0.0
    %598 = vmatpush.msra.mxu0 0.0
    %599 = vmatpush.msra.mxu0 0.0
    %600 = vmatpush.msra.mxu0 0.0
    %601 = vmatpush.msra.mxu0 0.0
    %602 = vmatpush.msra.mxu0 0.0
    %603 = vmatpush.msra.mxu0 0.0
    %v604 = vand.u32 %v479, 4294901760
    %v605 = vsub.f32 %v479, %v604
    %v606 = vand.u32 %v605, 4294901760
    %607 = vmatpush.msra.mxu0 %v606
    %v608 = vand.u32 %v467, 4294901760
    %v609 = vsub.f32 %v467, %v608
    %v610 = vand.u32 %v609, 4294901760
    %611 = vmatpush.msra.mxu0 %v610
    %v612 = vand.u32 %v475, 4294901760
    %613 = vmatmul.f32.gmra.mxu0 %v612
    %v614 = vpop.f32.mrf.mxu0
    %v615 = vadd.f32 %v588, %v614
    %616 = vdwg.mxu0
    %617 = vmatpush.msra.mxu0 0.0
    %618 = vmatpush.msra.mxu0 0.0
    %619 = vmatpush.msra.mxu0 0.0
    %620 = vmatpush.msra.mxu0 0.0
    %621 = vmatpush.msra.mxu0 0.0
    %622 = vmatpush.msra.mxu0 0.0
    %623 = vmatpush.msra.mxu0 0.0
    %624 = vmatpush.msra.mxu0 0.0
    %625 = vmatpush.msra.mxu0 0.0
    %626 = vmatpush.msra.mxu0 0.0
    %627 = vmatpush.msra.mxu0 0.0
    %628 = vmatpush.msra.mxu0 0.0
    %629 = vmatpush.msra.mxu0 0.0
    %630 = vmatpush.msra.mxu0 0.0
    %v631 = vand.u32 %v479, 4294901760
    %632 = vmatpush.msra.mxu0 %v631
    %v633 = vand.u32 %v467, 4294901760
    %634 = vmatpush.msra.mxu0 %v633
    %v635 = vand.u32 %v475, 4294901760
    %636 = vmatmul.f32.gmra.mxu0 %v635
    %v637 = vpop.f32.mrf.mxu0
    %v638 = vadd.f32 %v615, %v637
    %639 = vdwg.mxu0
    %v640 = vmax.f32 %v638, 0.0
    %642 = vset.pattern.permute.xlu0 8
    %643 = vperm.xlu0 %642, %v31
    %v644 = vpop.permute.xlu0 %643
    %vm646 = vcmask 64512
    %v647 = vsel %vm646, %v31, 0
    %649 = vmatpush.msra.mxu0 0.0
    %650 = vmatpush.msra.mxu0 0.0
    %651 = vmatpush.msra.mxu0 0.0
    %652 = vmatpush.msra.mxu0 0.0
    %653 = vmatpush.msra.mxu0 0.0
    %654 = vmatpush.msra.mxu0 0.0
    %655 = vmatpush.msra.mxu0 0.0
    %656 = vmatpush.msra.mxu0 0.0
    %657 = vmatpush.msra.mxu0 0.0
    %658 = vmatpush.msra.mxu0 0.0
    %659 = vmatpush.msra.mxu0 0.0
    %660 = vmatpush.msra.mxu0 0.0
    %661 = vmatpush.msra.mxu0 0.0
    %662 = vmatpush.msra.mxu0 0.0
    %663 = vmatpush.msra.mxu0 0.0
    %v664 = vand.u32 %v640, 4294901760
    %665 = vmatpush.msra.mxu0 %v664
    %v666 = vand.u32 %v647, 4294901760
    %v667 = vsub.f32 %v647, %v666
    %v668 = vand.u32 %v667, 4294901760
    %v669 = vsub.f32 %v667, %v668
    %v670 = vand.u32 %v669, 4294901760
    %671 = vmatmul.f32.gmra.mxu0 %v670
    %v672 = vpop.f32.mrf.mxu0
    %v673 = vadd.f32 %v644, %v672
    %674 = vdwg.mxu0
    %675 = vmatpush.msra.mxu0 0.0
    %676 = vmatpush.msra.mxu0 0.0
    %677 = vmatpush.msra.mxu0 0.0
    %678 = vmatpush.msra.mxu0 0.0
    %679 = vmatpush.msra.mxu0 0.0
    %680 = vmatpush.msra.mxu0 0.0
    %681 = vmatpush.msra.mxu0 0.0
    %682 = vmatpush.msra.mxu0 0.0
    %683 = vmatpush.msra.mxu0 0.0
    %684 = vmatpush.msra.mxu0 0.0
    %685 = vmatpush.msra.mxu0 0.0
    %686 = vmatpush.msra.mxu0 0.0
    %687 = vmatpush.msra.mxu0 0.0
    %688 = vmatpush.msra.mxu0 0.0
    %689 = vmatpush.msra.mxu0 0.0
    %v690 = vand.u32 %v640, 4294901760
    %v691 = vsub.f32 %v640, %v690
    %v692 = vand.u32 %v691, 4294901760
    %v693 = vsub.f32 %v691, %v692
    %v694 = vand.u32 %v693, 4294901760
    %695 = vmatpush.msra.mxu0 %v694
    %v696 = vand.u32 %v647, 4294901760
    %697 = vmatmul.f32.gmra.mxu0 %v696
    %v698 = vpop.f32.mrf.mxu0
    %v699 = vadd.f32 %v673, %v698
    %700 = vdwg.mxu0
    %701 = vmatpush.msra.mxu0 0.0
    %702 = vmatpush.msra.mxu0 0.0
    %703 = vmatpush.msra.mxu0 0.0
    %704 = vmatpush.msra.mxu0 0.0
    %705 = vmatpush.msra.mxu0 0.0
    %706 = vmatpush.msra.mxu0 0.0
    %707 = vmatpush.msra.mxu0 0.0
    %708 = vmatpush.msra.mxu0 0.0
    %709 = vmatpush.msra.mxu0 0.0
    %710 = vmatpush.msra.mxu0 0.0
    %711 = vmatpush.msra.mxu0 0.0
    %712 = vmatpush.msra.mxu0 0.0
    %713 = vmatpush.msra.mxu0 0.0
    %714 = vmatpush.msra.mxu0 0.0
    %715 = vmatpush.msra.mxu0 0.0
    %v716 = vand.u32 %v640, 4294901760
    %v717 = vsub.f32 %v640, %v716
    %718 = vmatpush.msra.mxu0 %v717
    %v719 = vand.u32 %v647, 4294901760
    %v720 = vsub.f32 %v647, %v719
    %721 = vmatmul.f32.gmra.mxu0 %v720
    %v722 = vpop.f32.mrf.mxu0
    %v723 = vadd.f32 %v699, %v722
    %724 = vdwg.mxu0
    %725 = vmatpush.msra.mxu0 0.0
    %726 = vmatpush.msra.mxu0 0.0
    %727 = vmatpush.msra.mxu0 0.0
    %728 = vmatpush.msra.mxu0 0.0
    %729 = vmatpush.msra.mxu0 0.0
    %730 = vmatpush.msra.mxu0 0.0
    %731 = vmatpush.msra.mxu0 0.0
    %732 = vmatpush.msra.mxu0 0.0
    %733 = vmatpush.msra.mxu0 0.0
    %734 = vmatpush.msra.mxu0 0.0
    %735 = vmatpush.msra.mxu0 0.0
    %736 = vmatpush.msra.mxu0 0.0
    %737 = vmatpush.msra.mxu0 0.0
    %738 = vmatpush.msra.mxu0 0.0
    %739 = vmatpush.msra.mxu0 0.0
    %v740 = vand.u32 %v640, 4294901760
    %741 = vmatpush.msra.mxu0 %v740
    %v742 = vand.u32 %v647, 4294901760
    %v743 = vsub.f32 %v647, %v742
    %v744 = vand.u32 %v743, 4294901760
    %745 = vmatmul.f32.gmra.mxu0 %v744
    %v746 = vpop.f32.mrf.mxu0
    %v747 = vadd.f32 %v723, %v746
    %748 = vdwg.mxu0
    %749 = vmatpush.msra.mxu0 0.0
    %750 = vmatpush.msra.mxu0 0.0
    %751 = vmatpush.msra.mxu0 0.0
    %752 = vmatpush.msra.mxu0 0.0
    %753 = vmatpush.msra.mxu0 0.0
    %754 = vmatpush.msra.mxu0 0.0
    %755 = vmatpush.msra.mxu0 0.0
    %756 = vmatpush.msra.mxu0 0.0
    %757 = vmatpush.msra.mxu0 0.0
    %758 = vmatpush.msra.mxu0 0.0
    %759 = vmatpush.msra.mxu0 0.0
    %760 = vmatpush.msra.mxu0 0.0
    %761 = vmatpush.msra.mxu0 0.0
    %762 = vmatpush.msra.mxu0 0.0
    %763 = vmatpush.msra.mxu0 0.0
    %v764 = vand.u32 %v640, 4294901760
    %v765 = vsub.f32 %v640, %v764
    %v766 = vand.u32 %v765, 4294901760
    %767 = vmatpush.msra.mxu0 %v766
    %v768 = vand.u32 %v647, 4294901760
    %769 = vmatmul.f32.gmra.mxu0 %v768
    %v770 = vpop.f32.mrf.mxu0
    %v771 = vadd.f32 %v747, %v770
    %772 = vdwg.mxu0
    %773 = vmatpush.msra.mxu0 0.0
    %774 = vmatpush.msra.mxu0 0.0
    %775 = vmatpush.msra.mxu0 0.0
    %776 = vmatpush.msra.mxu0 0.0
    %777 = vmatpush.msra.mxu0 0.0
    %778 = vmatpush.msra.mxu0 0.0
    %779 = vmatpush.msra.mxu0 0.0
    %780 = vmatpush.msra.mxu0 0.0
    %781 = vmatpush.msra.mxu0 0.0
    %782 = vmatpush.msra.mxu0 0.0
    %783 = vmatpush.msra.mxu0 0.0
    %784 = vmatpush.msra.mxu0 0.0
    %785 = vmatpush.msra.mxu0 0.0
    %786 = vmatpush.msra.mxu0 0.0
    %787 = vmatpush.msra.mxu0 0.0
    %v788 = vand.u32 %v640, 4294901760
    %789 = vmatpush.msra.mxu0 %v788
    %v790 = vand.u32 %v647, 4294901760
    %791 = vmatmul.f32.gmra.mxu0 %v790
    %v792 = vpop.f32.mrf.mxu0
    %v793 = vadd.f32 %v771, %v792
    %794 = vdwg.mxu0
    %v795 = vand.u32 2147483647, %v793
    %v796 = vsub.f32 0.0, %v795
    %v797 = vmul.f32 %v796, 1.442695
    %v798 = vpow.pop %v797
    %vm799 = vcmp.ge.f32.partialorder %v793, 0.0
    %v800 = vadd.f32 %v798, 1.0
    %v801 = vrcp.pop %v800
    %v802 = vmul.f32 %v800, %v801
    %v803 = vsub.f32 1.0, %v802
    %v804 = vmul.f32 %v801, %v803
    %v805 = vadd.f32 %v801, %v804
    %vm806 = vweird.f32 %v800
    %vm807 = vweird.f32 %v801
    %vm808 = vmor %vm806, %vm807
    %v809 = vsel %vm808, %v801, %v805
    %v810 = vand.u32 2147483647, %v800
    %vm811 = vcmp.eq.f32.partialorder %v810, 8.507059e+37
    %v812 = vand.u32 %v800, 2147483648
    %v813 = vor.u32 1.1754944e-38, %v812
    %v814 = vsel %vm811, %v813, %v809
    %v815 = vmul.f32 1.0, %v814
    %v816 = vmul.f32 %v798, %v814
    %v817 = vsel %vm799, %v815, %v816
    %818 = vst [vmem:[#allocation2] sm:$0x1] %v817
    // Predicated region
    $region10: #{mlp_forward.1} parent=1 // pred_check
      _
    $region11: #{mlp_forward.1} parent=1 // pred_check_branch
      %820 = sbr.rel (0) target = $region13
    $region12: #{mlp_forward.1} parent=1 // pred_region
      %822 = vsyncadd [#allocation3], 0
      %s824 = sshll.u32 [#allocation2], 4
      %s825 = int_to_ptr.vmem [resolvable:$true] %s824
      %s826 = sshll.u32 %s2, 4
      %s827 = int_to_ptr.hbm [resolvable:$true] %s826
      %829 = dma.vmem_to_hbm [thread:$0]  %s825, 16, %s827, [#allocation3]
    $region13: #{mlp_forward.1} parent=1 // pred_fallthru
      _
    // Predicated region
    $region14: #{mlp_forward.1} parent=1 // pred_check
      _
    $region15: #{mlp_forward.1} parent=1 // pred_check_branch
      %831 = sbr.rel (0) target = $region17
    $region16: #{mlp_forward.1} parent=1 // pred_region
      %833 = dma.done [#allocation3], 16
    $region17: #{mlp_forward.1} parent=1 // pred_fallthru
      _
    %834 = vsyncpa [#allocation3], 1

</llo_original>
